<compile_context>
chip_gen: v7x
topology: tpu7x:2x2x1
jax: 0.10.0
libtpu: 0.0.40
codegen_flags: <defaults>
</compile_context>

<pallas_src>
import functools

import jax
import jax.numpy as jnp
from jax.experimental import pallas as pl
from jax.experimental.pallas import tpu as pltpu


def _add_pos_kernel(x_ref, pos_ref, o_ref):
    # eval mode: dropout is identity -> fused broadcast add only
    o_ref[...] = (x_ref[...] + pos_ref[...]).astype(o_ref.dtype)


def _add_pos_dropout_kernel(threshold, scale, x_ref, pos_ref, bits_ref, o_ref):
    # training mode: broadcast add + inverted dropout, all in the input dtype
    y = x_ref[...] + pos_ref[...]
    # integer-threshold Bernoulli: drop with probability p = threshold / 2^32
    keep = bits_ref[...] >= jnp.uint32(threshold)
    o_ref[...] = jnp.where(keep, y * scale, 0.0).astype(o_ref.dtype)


def _pick_tile_rows(batch, row_bytes, target_bytes=2 << 20):
    """Largest batch-row tile that (a) divides B, (b) keeps the sublane dim
    either == B or a multiple of 8, and (c) stays under ~2 MiB per tile."""
    valid = [d for d in range(1, batch + 1)
             if batch % d == 0 and (d == batch or d % 8 == 0)]
    fitting = [d for d in valid if d * row_bytes <= target_bytes]
    return max(fitting) if fitting else min(valid)


def learnable_encoder(x, positional, *, p=0.1, training=False, rng_key=None):
    """x: [B, N, D], positional: [1, N, D] -> [B, N, D]."""
    B, N, D = x.shape
    assert positional.shape == (1, N, D)
    ND = N * D
    itemsize = jnp.dtype(x.dtype).itemsize

    # Lane-dense layout: free reshapes (contiguous), last dim = N*D.
    x2 = x.reshape(B, ND)
    pos2 = positional.reshape(1, ND).astype(x.dtype)

    tb = _pick_tile_rows(B, ND * itemsize)
    grid = (B // tb,)

    x_spec = pl.BlockSpec((tb, ND), lambda b: (b, 0))
    # NOTE: positional's index_map is constant; double-buffering it wastes a
    # little VMEM but pl.Buffered(1) support is version-dependent, so we keep
    # the default (it is tiny: N*D*itemsize bytes).
    pos_spec = pl.BlockSpec((1, ND), lambda b: (0, 0))
    out_spec = pl.BlockSpec((tb, ND), lambda b: (b, 0))

    compiler_params = pltpu.CompilerParams(
        # batch axis is fully independent (randomness comes from outside the
        # kernel), so let v7x shard it across both TensorCores
        dimension_semantics=("parallel",),
        # headroom for the larger batch-row tiles on v5e's 16 MiB default
        # scoped VMEM; still well under v7x's 64 MiB physical VMEM
        vmem_limit_bytes=48 * 1024 * 1024,
    )

    use_dropout = bool(training) and float(p) > 0.0
    if use_dropout:
        if rng_key is None:
            rng_key = jax.random.PRNGKey(0)
        bits = jax.random.bits(rng_key, (B, ND), dtype=jnp.uint32)
        threshold = min(int(float(p) * (1 << 32)), (1 << 32) - 1)
        scale = 1.0 / (1.0 - float(p))
        kernel = functools.partial(_add_pos_dropout_kernel, threshold, scale)
        in_specs = [x_spec, pos_spec, pl.BlockSpec((tb, ND), lambda b: (b, 0))]
        args = (x2, pos2, bits)
        bytes_accessed = (2 * B + 1) * ND * itemsize + B * ND * 4
        flops = 3 * B * ND
    else:
        kernel = _add_pos_kernel
        in_specs = [x_spec, pos_spec]
        args = (x2, pos2)
        bytes_accessed = (2 * B + 1) * ND * itemsize
        flops = B * ND

    out2 = pl.pallas_call(
        kernel,
        out_shape=jax.ShapeDtypeStruct((B, ND), x.dtype),
        grid=grid,
        in_specs=in_specs,
        out_specs=out_spec,
        compiler_params=compiler_params,
        cost_estimate=pl.CostEstimate(
            flops=flops, transcendentals=0, bytes_accessed=bytes_accessed),
    )(*args)

    return out2.reshape(B, N, D)


if __name__ == "__main__":
    B, N, D = 2, 8, 32  # batch, n_patches, embed_dim
    key = jax.random.PRNGKey(0)
    kx, kp, kd = jax.random.split(key, 3)

    x = jax.random.normal(kx, (B, N, D), dtype=jnp.float32)
    # deterministic init matching nn.Parameter(torch.empty(1,N,D).normal_(std=0.02))
    positional = 0.02 * jax.random.normal(kp, (1, N, D), dtype=jnp.float32)

    # eval-mode forward (dropout = identity): exact, checkable semantics
    out_eval = jax.block_until_ready(
        learnable_encoder(x, positional, p=0.1, training=False))
    ref = x + positional
    assert jnp.allclose(out_eval, ref, atol=1e-6), "eval-mode mismatch"

    # training-mode forward (inverted dropout); every element must be either
    # 0 (dropped) or (x + positional) / (1 - p) (kept)
    out_train = jax.block_until_ready(
        learnable_encoder(x, positional, p=0.1, training=True, rng_key=kd))
    assert out_train.shape == (B, N, D)
    scaled = ref / (1.0 - 0.1)
    ok = jnp.isclose(out_train, 0.0, atol=1e-6) | jnp.isclose(
        out_train, scaled, atol=1e-5)
    assert bool(jnp.all(ok)), "training-mode dropout semantics mismatch"

    print("KERNEL_OK")
</pallas_src>

<mosaic_0001>
module attributes {stable_mosaic.version = 11 : i64} {
  func.func @_add_pos_kernel(%arg0: i32, %arg1: memref<2x256xf32, #tpu.memory_space<vmem>>, %arg2: memref<1x256xf32, #tpu.memory_space<vmem>>, %arg3: memref<2x256xf32, #tpu.memory_space<vmem>>) attributes {dimension_semantics = [#tpu.dimension_semantics<parallel>], iteration_bounds = array<i64: 1>, scalar_prefetch = 0 : i64, scratch_operands = 0 : i64, tpu.core_type = #tpu.core_type<tc>, window_params = [{transform_indices = @transform_0, window_bounds = array<i64: 2, 256>}, {pipeline_mode = #tpu.pipeline_mode<synchronous>, transform_indices = @transform_1, window_bounds = array<i64: 1, 256>}, {transform_indices = @transform_2, window_bounds = array<i64: 2, 256>}]} {
    %c0 = arith.constant 0 : index
    %c0_0 = arith.constant 0 : index
    %0 = vector.load %arg1[%c0, %c0_0] : memref<2x256xf32, #tpu.memory_space<vmem>>, vector<2x256xf32>
    %c0_1 = arith.constant 0 : index
    %c0_2 = arith.constant 0 : index
    %1 = vector.load %arg2[%c0_1, %c0_2] : memref<1x256xf32, #tpu.memory_space<vmem>>, vector<1x256xf32>
    %2 = vector.broadcast %1 : vector<1x256xf32> to vector<2x256xf32>
    %3 = arith.addf %0, %2 : vector<2x256xf32>
    %c0_3 = arith.constant 0 : index
    %c0_4 = arith.constant 0 : index
    %4 = vector.load %arg3[%c0_3, %c0_4] : memref<2x256xf32, #tpu.memory_space<vmem>>, vector<2x256xf32>
    tpu.vector_store %arg3[%c0_3, %c0_4], %3 {strides = array<i32>} : memref<2x256xf32, #tpu.memory_space<vmem>>, vector<2x256xf32>,
    return
  }
  func.func @transform_0(%arg0: i32) -> (i32, i32) {
    %c0_i32 = arith.constant 0 : i32
    %c0_i32_0 = arith.constant 0 : i32
    return %arg0, %c0_i32 : i32, i32
  }
  func.func @transform_1(%arg0: i32) -> (i32, i32) {
    %c0_i32 = arith.constant 0 : i32
    %c0_i32_0 = arith.constant 0 : i32
    %c0_i32_1 = arith.constant 0 : i32
    return %c0_i32, %c0_i32_0 : i32, i32
  }
  func.func @transform_2(%arg0: i32) -> (i32, i32) {
    %c0_i32 = arith.constant 0 : i32
    %c0_i32_0 = arith.constant 0 : i32
    return %arg0, %c0_i32 : i32, i32
  }
}

</mosaic_0001>

<llo_original>
// kernel: tpu_custom_call.1
$region0: #{tpu_custom_call.1}
  #allocation0 [shape = 'u32[]', space=smem, size = 0x4, offset = 0x4, fixed_abs, tag = 'smem constant byte address 0x4 - core index']
  #allocation1 [shape = 'u32[144,128]{1,0:T(1,128)}', space=vmem, size = 0x12000, scoped, tag = 'internal scratch']
  %s0 = inlined_call_operand.hbm [shape: f32[2,256], index: 0, kind: input, shape index: {}]
  %s1 = inlined_call_operand.vmem [shape: f32[1,256], index: 1, kind: input, shape index: {}]
  %s2 = inlined_call_operand.hbm [shape: f32[2,256], index: 2, kind: output, shape index: {}]
  %s3 = sld [smem:[#allocation0]]
  $region22: #{tpu_custom_call.1} parent=0
    _
  %s5 = ssub.s32 1, %s3
  %s6 = scalar_select 0, %s5, %s3
  $region1: #{tpu_custom_call.1} parent=0
    #allocation2 [shape = 'u8[2048]{0}', space=vmem, size = 0x800, scoped, tag = 'input window, operand 0, single buffered']
    #allocation3 [shape = 's32[1]{0}', space=sflag, size = 0x4, scoped, tag = 'scoped memory for tpu_custom_call.1']
    #allocation4 [shape = 's32[1]{0}', space=sflag, size = 0x4, scoped, tag = 'scoped memory for tpu_custom_call.1']
    #allocation5 [shape = 'u8[2048]{0}', space=vmem, size = 0x800, scoped, tag = 'output window, operand 0, single buffered']
    %7 = vsyncpa [#allocation3], 0
    %8 = vsyncpa [#allocation4], 0
    // Predicated region
    $region2: #{tpu_custom_call.1} parent=1 // pred_check
      _
    $region3: #{tpu_custom_call.1} parent=1 // pred_check_branch
      %10 = sbr.rel (0) target = $region5
    $region4: #{tpu_custom_call.1} parent=1 // pred_region
      %s12 = ssub.s32 64, 64
      %13 = vsyncadd [#allocation3], %s12
      %s15 = sshll.u32 [#allocation2], 4
      %s16 = int_to_ptr.vmem [resolvable:$true] %s15
      %18 = dma.hbm_to_vmem [thread:$0]  %s0, 64, %s16, [#allocation3]
    $region5: #{tpu_custom_call.1} parent=1 // pred_fallthru
      _
    // Predicated region
    $region6: #{tpu_custom_call.1} parent=1 // pred_check
      _
    $region7: #{tpu_custom_call.1} parent=1 // pred_check_branch
      %20 = sbr.rel (0) target = $region9
    $region8: #{tpu_custom_call.1} parent=1 // pred_region
      _
    $region9: #{tpu_custom_call.1} parent=1 // pred_fallthru
      _
    // Predicated region
    $region10: #{tpu_custom_call.1} parent=1 // pred_check
      _
    $region11: #{tpu_custom_call.1} parent=1 // pred_check_branch
      %22 = sbr.rel (0) target = $region13
    $region12: #{tpu_custom_call.1} parent=1 // pred_region
      %23 = dma.done [#allocation3], 64
    $region13: #{tpu_custom_call.1} parent=1 // pred_fallthru
      _
    %v24 = vld [vmem:[#allocation2] sm:$0xf]
    %v25 = vld [vmem:[%s1] sm:$0x3]
    %v27 = vlaneseq
    %v28 = vshrl.u32 %v27, 7
    %v29 = vsub.s32 0, %v28
    %v30 = vrot.slane %v25, %v29
    %v31 = vlaneseq
    %v32 = vshrl.u32 %v31, 7
    %v33 = vsub.s32 1, %v32
    %v34 = vrot.slane %v25, %v33
    %v35 = vcombine.low %v30, %v34
    %v37 = vunpack.c.l.s4 1983009808
    %v38 = vunpack.c.0.s8 %v37
    %v39 = vlaneseq
    %v40 = vshrl.u32 %v39, 7
    %v41 = vsub.s32 %v38, %v40
    %v42 = vrot.slane %v35, %v41
    %v44 = vadd.f32 %v24, %v42
    %45 = vst [vmem:[#allocation5] sm:$0xf] %v44
    // Predicated region
    $region14: #{tpu_custom_call.1} parent=1 // pred_check
      _
    $region15: #{tpu_custom_call.1} parent=1 // pred_check_branch
      %47 = sbr.rel (0) target = $region17
    $region16: #{tpu_custom_call.1} parent=1 // pred_region
      %s49 = ssub.s32 64, 64
      %50 = vsyncadd [#allocation4], %s49
      %s52 = sshll.u32 [#allocation5], 4
      %s53 = int_to_ptr.vmem [resolvable:$true] %s52
      %55 = dma.vmem_to_hbm [thread:$0]  %s53, 64, %s2, [#allocation4]
    $region17: #{tpu_custom_call.1} parent=1 // pred_fallthru
      _
    // Predicated region
    $region18: #{tpu_custom_call.1} parent=1 // pred_check
      _
    $region19: #{tpu_custom_call.1} parent=1 // pred_check_branch
      %57 = sbr.rel (0) target = $region21
    $region20: #{tpu_custom_call.1} parent=1 // pred_region
      %58 = dma.done [#allocation4], 64
    $region21: #{tpu_custom_call.1} parent=1 // pred_fallthru
      _
    %59 = vsyncpa [#allocation3], 1
    %60 = vsyncpa [#allocation4], 1

</llo_original>
